<compile_context>
chip_gen: v7x
topology: tpu7x:2x2x1
jax: 0.10.0
libtpu: 0.0.40
codegen_flags: <defaults>
</compile_context>

<pallas_src>
import jax
import jax.numpy as jnp
from jax.experimental import pallas as pl
from jax.experimental.pallas import tpu as pltpu

# Per-block VMEM budget. With default double-buffering of input + output this
# means at most 4 x 8 MiB = 32 MiB resident, safe on v5e/v6e (128 MiB) and
# v7x (64 MiB physical per TensorCore).
_BLOCK_BUDGET_BYTES = 8 << 20
# Scoped-VMEM limit handed to Mosaic: > 4x block budget, < v7x 64 MiB physical.
_VMEM_LIMIT_BYTES = 48 << 20
# Preferred lane-dense slab widths (multiples of 128, largest first).
_SLAB_WIDTHS = (4096, 2048, 1024, 512, 384, 256, 128)
_LANE_CAP = 4096


def _copy_kernel(x_ref, o_ref):
    # Pure lane-dense 2D copy of the current tile (full-width vld/vst).
    o_ref[...] = x_ref[...]


def _choose_slab(n, flat):
    """Copy-friendly (R, C) factorization of n*flat, independent of (n, flat).

    C is the largest preferred multiple of 128 that divides the total element
    count, so every lane tile is dense. Falls back to the logical (n, flat)
    shape when no such width exists (ragged lane edge handled by masking).
    """
    total = n * flat
    for c in _SLAB_WIDTHS:
        if total % c == 0:
            return total // c, c
    return n, flat


def _pick_lane_block(cols):
    """Lane-axis block: full extent if <= cap, else an exact 128-multiple divisor."""
    if cols <= _LANE_CAP:
        return cols  # full extent is always legal
    b = _LANE_CAP
    while b >= 128:
        if cols % b == 0:
            return b
        b -= 128
    return _LANE_CAP  # ragged last lane tile (correct, just masked stores)


def _pick_row_block(rows, lane_block, itemsize):
    """Row-axis block: VMEM-budgeted, multiple of 8, exact divisor when possible."""
    if rows <= 8:
        return rows  # full extent
    cap = max(_BLOCK_BUDGET_BYTES // (lane_block * itemsize), 8)
    cap = max(min((cap // 8) * 8, (rows // 8) * 8), 8)
    if rows <= cap:
        return rows  # whole extent fits the budget
    b = cap
    while b >= 8:
        if rows % b == 0:
            return b  # exact divisor -> no ragged row tiles
        b -= 8
    return cap  # ragged last row tile (correct, masked sublanes)


def flatten(x):
    """Pallas equivalent of torch's `x.view(x.size(0), -1)` (contiguous input)."""
    n = x.shape[0]
    flat = 1
    for d in x.shape[1:]:
        flat *= d

    if n == 0 or flat == 0:
        return jnp.zeros((n, flat), x.dtype)

    itemsize = jnp.dtype(x.dtype).itemsize

    # Metadata-only reshape to a lane-dense copy slab; row-major element order
    # is identical to the (n, flat) view, so copy + reshape back == torch .view.
    rows, cols = _choose_slab(n, flat)
    x2 = x.reshape(rows, cols)

    bc = _pick_lane_block(cols)
    br = _pick_row_block(rows, bc, itemsize)

    grid = (pl.cdiv(rows, br), pl.cdiv(cols, bc))

    y2 = pl.pallas_call(
        _copy_kernel,
        out_shape=jax.ShapeDtypeStruct((rows, cols), x.dtype),
        grid=grid,
        in_specs=[pl.BlockSpec((br, bc), lambda i, j: (i, j))],
        out_specs=pl.BlockSpec((br, bc), lambda i, j: (i, j)),
        compiler_params=pltpu.CompilerParams(
            dimension_semantics=("parallel", "parallel"),
            vmem_limit_bytes=_VMEM_LIMIT_BYTES,
        ),
        cost_estimate=pl.CostEstimate(
            flops=0,
            transcendentals=0,
            bytes_accessed=2 * rows * cols * itemsize,
        ),
    )(x2)

    # Metadata-only reshape back to the logical flattened output shape.
    return y2.reshape(n, flat)


if __name__ == "__main__":
    key = jax.random.PRNGKey(0)
    # Small NCHW input consistent with a conv-style feature map.
    x = jax.random.normal(key, (2, 4, 16, 16), dtype=jnp.float32)

    y = flatten(x)
    jax.block_until_ready(y)

    # Reference: plain JAX row-major reshape (== torch .view on contiguous x).
    y_ref = x.reshape(x.shape[0], -1)
    assert y.shape == (2, 4 * 16 * 16), y.shape
    assert y.dtype == x.dtype
    assert jnp.array_equal(y, y_ref)

    print("KERNEL_OK")
</pallas_src>

<mosaic_0001>
module attributes {stable_mosaic.version = 11 : i64} {
  func.func @_copy_kernel(%arg0: i32, %arg1: i32, %arg2: memref<1x2048xf32, #tpu.memory_space<vmem>>, %arg3: memref<1x2048xf32, #tpu.memory_space<vmem>>) attributes {dimension_semantics = [#tpu.dimension_semantics<parallel>, #tpu.dimension_semantics<parallel>], iteration_bounds = array<i64: 1, 1>, scalar_prefetch = 0 : i64, scratch_operands = 0 : i64, tpu.core_type = #tpu.core_type<tc>, window_params = [{transform_indices = @transform_0, window_bounds = array<i64: 1, 2048>}, {transform_indices = @transform_1, window_bounds = array<i64: 1, 2048>}]} {
    %c0 = arith.constant 0 : index
    %c0_0 = arith.constant 0 : index
    %0 = vector.load %arg2[%c0, %c0_0] : memref<1x2048xf32, #tpu.memory_space<vmem>>, vector<1x2048xf32>
    %c0_1 = arith.constant 0 : index
    %c0_2 = arith.constant 0 : index
    %1 = vector.load %arg3[%c0_1, %c0_2] : memref<1x2048xf32, #tpu.memory_space<vmem>>, vector<1x2048xf32>
    tpu.vector_store %arg3[%c0_1, %c0_2], %0 {strides = array<i32>} : memref<1x2048xf32, #tpu.memory_space<vmem>>, vector<1x2048xf32>,
    return
  }
  func.func @transform_0(%arg0: i32, %arg1: i32) -> (i32, i32) {
    %c0_i32 = arith.constant 0 : i32
    return %arg0, %arg1 : i32, i32
  }
  func.func @transform_1(%arg0: i32, %arg1: i32) -> (i32, i32) {
    %c0_i32 = arith.constant 0 : i32
    return %arg0, %arg1 : i32, i32
  }
}

</mosaic_0001>

<llo_original>
// kernel: tpu_custom_call.1
$region0: #{tpu_custom_call.1}
  #allocation0 [shape = 'u32[]', space=smem, size = 0x4, offset = 0x4, fixed_abs, tag = 'smem constant byte address 0x4 - core index']
  #allocation1 [shape = 'u32[144,128]{1,0:T(1,128)}', space=vmem, size = 0x12000, scoped, tag = 'internal scratch']
  %s0 = inlined_call_operand.hbm [shape: f32[1,2048], index: 0, kind: input, shape index: {}]
  %s1 = inlined_call_operand.hbm [shape: f32[1,2048], index: 1, kind: output, shape index: {}]
  %s2 = sld [smem:[#allocation0]]
  $region18: #{tpu_custom_call.1} parent=0
    _
  %s4 = ssub.s32 1, %s2
  %s5 = scalar_select 0, %s4, %s2
  $region1: #{tpu_custom_call.1} parent=0
    #allocation2 [shape = 'u8[8192]{0}', space=vmem, size = 0x2000, scoped, tag = 'input window, operand 0, single buffered']
    #allocation3 [shape = 's32[1]{0}', space=sflag, size = 0x4, scoped, tag = 'scoped memory for tpu_custom_call.1']
    #allocation4 [shape = 's32[1]{0}', space=sflag, size = 0x4, scoped, tag = 'scoped memory for tpu_custom_call.1']
    #allocation5 [shape = 'u8[8192]{0}', space=vmem, size = 0x2000, scoped, tag = 'output window, operand 0, single buffered']
    %6 = vsyncpa [#allocation3], 0
    %7 = vsyncpa [#allocation4], 0
    // Predicated region
    $region2: #{tpu_custom_call.1} parent=1 // pred_check
      _
    $region3: #{tpu_custom_call.1} parent=1 // pred_check_branch
      %9 = sbr.rel (0) target = $region5
    $region4: #{tpu_custom_call.1} parent=1 // pred_region
      %s11 = ssub.s32 256, 256
      %12 = vsyncadd [#allocation3], %s11
      %s14 = sshll.u32 [#allocation2], 4
      %s15 = int_to_ptr.vmem [resolvable:$true] %s14
      %17 = dma.hbm_to_vmem [thread:$0]  %s0, 256, %s15, [#allocation3]
    $region5: #{tpu_custom_call.1} parent=1 // pred_fallthru
      _
    // Predicated region
    $region6: #{tpu_custom_call.1} parent=1 // pred_check
      _
    $region7: #{tpu_custom_call.1} parent=1 // pred_check_branch
      %19 = sbr.rel (0) target = $region9
    $region8: #{tpu_custom_call.1} parent=1 // pred_region
      %20 = dma.done [#allocation3], 256
    $region9: #{tpu_custom_call.1} parent=1 // pred_fallthru
      _
    %v21 = vld [vmem:[#allocation2] sm:$0xff]
    %v22 = vld [vmem:[#allocation2 + $0x8] sm:$0xff]
    %23 = vst [vmem:[#allocation5] sm:$0xff] %v21
    %24 = vst [vmem:[#allocation5 + $0x8] sm:$0xff] %v22
    // Predicated region
    $region10: #{tpu_custom_call.1} parent=1 // pred_check
      _
    $region11: #{tpu_custom_call.1} parent=1 // pred_check_branch
      %26 = sbr.rel (0) target = $region13
    $region12: #{tpu_custom_call.1} parent=1 // pred_region
      %s28 = ssub.s32 256, 256
      %29 = vsyncadd [#allocation4], %s28
      %s31 = sshll.u32 [#allocation5], 4
      %s32 = int_to_ptr.vmem [resolvable:$true] %s31
      %34 = dma.vmem_to_hbm [thread:$0]  %s32, 256, %s1, [#allocation4]
    $region13: #{tpu_custom_call.1} parent=1 // pred_fallthru
      _
    // Predicated region
    $region14: #{tpu_custom_call.1} parent=1 // pred_check
      _
    $region15: #{tpu_custom_call.1} parent=1 // pred_check_branch
      %36 = sbr.rel (0) target = $region17
    $region16: #{tpu_custom_call.1} parent=1 // pred_region
      %37 = dma.done [#allocation4], 256
    $region17: #{tpu_custom_call.1} parent=1 // pred_fallthru
      _
    %38 = vsyncpa [#allocation3], 1
    %39 = vsyncpa [#allocation4], 1

</llo_original>
